<compile_context>
chip_gen: v6e
topology: v6e:2x2x1
jax: 0.10.0
libtpu: 0.0.40
codegen_flags: <defaults>
</compile_context>

<pallas_src>
import jax
import jax.numpy as jnp
from jax.experimental import pallas as pl
from jax.experimental.pallas import tpu as pltpu

IN_F = 42      # 6 * 7 Connect-4 board
H1 = 128
H2 = 64
OUT_F = 7
N_PAD = 128    # lane-dense padded output width


def _round_up(n, m):
    return ((n + m - 1) // m) * m


def mlp_kernel(x_ref, w1_ref, b1_ref, w2_ref, b2_ref, w3_ref, b3_ref, o_ref):
    # fc1 + relu  (bf16 operands, f32 accumulation on the MXU)
    h1 = jnp.dot(x_ref[...], w1_ref[...], preferred_element_type=jnp.float32)
    h1 = jnp.maximum(h1 + b1_ref[...], 0.0)
    # fc2 + relu
    h2 = jnp.dot(h1.astype(jnp.bfloat16), w2_ref[...],
                 preferred_element_type=jnp.float32)
    h2 = jnp.maximum(h2 + b2_ref[...], 0.0)
    # fc3 (no activation), lane-dense padded to 128 output columns
    h3 = jnp.dot(h2.astype(jnp.bfloat16), w3_ref[...],
                 preferred_element_type=jnp.float32)
    o_ref[...] = (h3 + b3_ref[...]).astype(o_ref.dtype)


def connect4_forward(x, params):
    """x: (B, 42) float32. params: dict of transposed (in, out) weights + (1, out) biases."""
    B = x.shape[0]

    # Batch tile: 512 rows when B is large (keeps the 256-wide MXU fed on
    # v6e/v7x), otherwise the batch rounded to a 16-sublane multiple (bf16).
    TB = 512 if B >= 512 else _round_up(B, 16)
    B_pad = _round_up(B, TB)

    # bf16 matmul operands, f32 biases; zero-pad fc3 to a lane-dense 128-wide output.
    x_p = x if B_pad == B else jnp.pad(x, ((0, B_pad - B), (0, 0)))
    x_p = x_p.astype(jnp.bfloat16)
    w1 = params["w1"].astype(jnp.bfloat16)
    w2 = params["w2"].astype(jnp.bfloat16)
    w3 = jnp.pad(params["w3"], ((0, 0), (0, N_PAD - OUT_F))).astype(jnp.bfloat16)
    b1 = params["b1"].astype(jnp.float32)
    b2 = params["b2"].astype(jnp.float32)
    b3 = jnp.pad(params["b3"], ((0, 0), (0, N_PAD - OUT_F))).astype(jnp.float32)

    grid = (B_pad // TB,)

    # VMEM budget: double-buffered x/out tiles + resident weights + intermediates.
    x_tile_b = TB * IN_F * 2
    out_tile_b = TB * N_PAD * 4
    weight_b = (IN_F * H1 + H1 * H2 + H2 * N_PAD) * 2 + (H1 + H2 + N_PAD) * 4
    interm_b = TB * (H1 + H2 + N_PAD) * 4
    vmem_limit = max(4 << 20, 2 * (2 * (x_tile_b + out_tile_b) + weight_b + interm_b))

    cost = pl.CostEstimate(
        flops=2 * B_pad * (IN_F * H1 + H1 * H2 + H2 * N_PAD),
        transcendentals=0,
        bytes_accessed=B_pad * IN_F * 2 + B_pad * N_PAD * 4 + weight_b,
    )

    def resident(shape):
        # Same block for every grid step -> stays VMEM-resident, no re-DMA.
        return pl.BlockSpec(shape, lambda i: (0, 0))

    out_padded = pl.pallas_call(
        mlp_kernel,
        out_shape=jax.ShapeDtypeStruct((B_pad, N_PAD), jnp.float32),
        grid=grid,
        in_specs=[
            pl.BlockSpec((TB, IN_F), lambda i: (i, 0)),   # x: batch-tiled, pipelined
            resident((IN_F, H1)), resident((1, H1)),
            resident((H1, H2)), resident((1, H2)),
            resident((H2, N_PAD)), resident((1, N_PAD)),
        ],
        out_specs=pl.BlockSpec((TB, N_PAD), lambda i: (i, 0)),
        compiler_params=pltpu.CompilerParams(
            dimension_semantics=("parallel",),   # 2-TC sharding on v7x; harmless elsewhere
            vmem_limit_bytes=int(vmem_limit),
        ),
        cost_estimate=cost,
    )(x_p, w1, b1, w2, b2, w3, b3)

    return out_padded[:B, :OUT_F]


def init_params(key):
    """Deterministic init mirroring nn.Linear shapes (stored transposed: (in, out))."""
    ks = jax.random.split(key, 6)

    def linear(kw, kb, fan_in, fan_out):
        bound = 1.0 / jnp.sqrt(fan_in)
        w = jax.random.uniform(kw, (fan_in, fan_out), jnp.float32, -bound, bound)
        b = jax.random.uniform(kb, (1, fan_out), jnp.float32, -bound, bound)
        return w, b

    w1, b1 = linear(ks[0], ks[1], IN_F, H1)
    w2, b2 = linear(ks[2], ks[3], H1, H2)
    w3, b3 = linear(ks[4], ks[5], H2, OUT_F)
    return dict(w1=w1, b1=b1, w2=w2, b2=b2, w3=w3, b3=b3)


def reference_forward_bf16(x, p):
    """JAX reference with the same bf16-operand / f32-accumulate recipe as the kernel."""
    h1 = jnp.dot(x.astype(jnp.bfloat16), p["w1"].astype(jnp.bfloat16),
                 preferred_element_type=jnp.float32) + p["b1"]
    h1 = jnp.maximum(h1, 0.0)
    h2 = jnp.dot(h1.astype(jnp.bfloat16), p["w2"].astype(jnp.bfloat16),
                 preferred_element_type=jnp.float32) + p["b2"]
    h2 = jnp.maximum(h2, 0.0)
    return jnp.dot(h2.astype(jnp.bfloat16), p["w3"].astype(jnp.bfloat16),
                   preferred_element_type=jnp.float32) + p["b3"]


def reference_forward_f32(x, p):
    h1 = jnp.maximum(x @ p["w1"] + p["b1"], 0.0)
    h2 = jnp.maximum(h1 @ p["w2"] + p["b2"], 0.0)
    return h2 @ p["w3"] + p["b3"]


if __name__ == "__main__":
    key = jax.random.PRNGKey(0)
    k_x, k_p = jax.random.split(key)
    batch = 8
    x = jax.random.normal(k_x, (batch, IN_F), jnp.float32)  # Connect-4 board: 6*7 = 42 cells
    params = init_params(k_p)

    out = connect4_forward(x, params)
    out = jax.block_until_ready(out)

    assert out.shape == (batch, OUT_F)
    # Exact-recipe reference (bf16 operands, f32 accumulate) — tight tolerance.
    ref = reference_forward_bf16(x, params)
    assert jnp.allclose(out, ref, atol=5e-3, rtol=5e-3), "mismatch vs bf16 JAX reference"
    # Sanity vs the full-f32 math of the original PyTorch module — loose tolerance for bf16 cast.
    ref32 = reference_forward_f32(x, params)
    assert jnp.allclose(out, ref32, atol=5e-2, rtol=5e-2), "mismatch vs f32 JAX reference"
    print("KERNEL_OK")
</pallas_src>

<mosaic_0001>
module attributes {stable_mosaic.version = 11 : i64} {
  func.func @mlp_kernel(%arg0: i32, %arg1: memref<16x42xbf16, #tpu.memory_space<vmem>>, %arg2: memref<42x128xbf16, #tpu.memory_space<vmem>>, %arg3: memref<1x128xf32, #tpu.memory_space<vmem>>, %arg4: memref<128x64xbf16, #tpu.memory_space<vmem>>, %arg5: memref<1x64xf32, #tpu.memory_space<vmem>>, %arg6: memref<64x128xbf16, #tpu.memory_space<vmem>>, %arg7: memref<1x128xf32, #tpu.memory_space<vmem>>, %arg8: memref<16x128xf32, #tpu.memory_space<vmem>>) attributes {dimension_semantics = [#tpu.dimension_semantics<parallel>], iteration_bounds = array<i64: 1>, scalar_prefetch = 0 : i64, scratch_operands = 0 : i64, tpu.core_type = #tpu.core_type<tc>, window_params = [{transform_indices = @transform_0, window_bounds = array<i64: 16, 42>}, {pipeline_mode = #tpu.pipeline_mode<synchronous>, transform_indices = @transform_1, window_bounds = array<i64: 42, 128>}, {pipeline_mode = #tpu.pipeline_mode<synchronous>, transform_indices = @transform_2, window_bounds = array<i64: 1, 128>}, {pipeline_mode = #tpu.pipeline_mode<synchronous>, transform_indices = @transform_3, window_bounds = array<i64: 128, 64>}, {pipeline_mode = #tpu.pipeline_mode<synchronous>, transform_indices = @transform_4, window_bounds = array<i64: 1, 64>}, {pipeline_mode = #tpu.pipeline_mode<synchronous>, transform_indices = @transform_5, window_bounds = array<i64: 64, 128>}, {pipeline_mode = #tpu.pipeline_mode<synchronous>, transform_indices = @transform_6, window_bounds = array<i64: 1, 128>}, {transform_indices = @transform_7, window_bounds = array<i64: 16, 128>}]} {
    %c0 = arith.constant 0 : index
    %c0_0 = arith.constant 0 : index
    %0 = vector.load %arg1[%c0, %c0_0] : memref<16x42xbf16, #tpu.memory_space<vmem>>, vector<16x42xbf16>
    %c0_1 = arith.constant 0 : index
    %c0_2 = arith.constant 0 : index
    %1 = vector.load %arg2[%c0_1, %c0_2] : memref<42x128xbf16, #tpu.memory_space<vmem>>, vector<42x128xbf16>
    %cst = arith.constant dense<0.000000e+00> : vector<16x128xf32>
    %2 = tpu.matmul %0, %1, %cst {dimension_numbers = #tpu.dot_dimension_numbers<[1], [0], [0], [1], [0, 0, 1, 1], [], []>} : vector<16x42xbf16>, vector<42x128xbf16>, vector<16x128xf32> -> vector<16x128xf32>
    %c0_3 = arith.constant 0 : index
    %c0_4 = arith.constant 0 : index
    %3 = vector.load %arg3[%c0_3, %c0_4] : memref<1x128xf32, #tpu.memory_space<vmem>>, vector<1x128xf32>
    %4 = vector.broadcast %3 : vector<1x128xf32> to vector<16x128xf32>
    %5 = arith.addf %2, %4 : vector<16x128xf32>
    %cst_5 = arith.constant 0.000000e+00 : f32
    %6 = vector.broadcast %cst_5 : f32 to vector<16x128xf32>
    %7 = arith.maximumf %5, %6 : vector<16x128xf32>
    %8 = arith.truncf %7 : vector<16x128xf32> to vector<16x128xbf16>
    %c0_6 = arith.constant 0 : index
    %c0_7 = arith.constant 0 : index
    %9 = vector.load %arg4[%c0_6, %c0_7] : memref<128x64xbf16, #tpu.memory_space<vmem>>, vector<128x64xbf16>
    %cst_8 = arith.constant dense<0.000000e+00> : vector<16x64xf32>
    %10 = tpu.matmul %8, %9, %cst_8 {dimension_numbers = #tpu.dot_dimension_numbers<[1], [0], [0], [1], [0, 0, 1, 1], [], []>} : vector<16x128xbf16>, vector<128x64xbf16>, vector<16x64xf32> -> vector<16x64xf32>
    %c0_9 = arith.constant 0 : index
    %c0_10 = arith.constant 0 : index
    %11 = vector.load %arg5[%c0_9, %c0_10] : memref<1x64xf32, #tpu.memory_space<vmem>>, vector<1x64xf32>
    %12 = vector.broadcast %11 : vector<1x64xf32> to vector<16x64xf32>
    %13 = arith.addf %10, %12 : vector<16x64xf32>
    %cst_11 = arith.constant 0.000000e+00 : f32
    %14 = vector.broadcast %cst_11 : f32 to vector<16x64xf32>
    %15 = arith.maximumf %13, %14 : vector<16x64xf32>
    %16 = arith.truncf %15 : vector<16x64xf32> to vector<16x64xbf16>
    %c0_12 = arith.constant 0 : index
    %c0_13 = arith.constant 0 : index
    %17 = vector.load %arg6[%c0_12, %c0_13] : memref<64x128xbf16, #tpu.memory_space<vmem>>, vector<64x128xbf16>
    %cst_14 = arith.constant dense<0.000000e+00> : vector<16x128xf32>
    %18 = tpu.matmul %16, %17, %cst_14 {dimension_numbers = #tpu.dot_dimension_numbers<[1], [0], [0], [1], [0, 0, 1, 1], [], []>} : vector<16x64xbf16>, vector<64x128xbf16>, vector<16x128xf32> -> vector<16x128xf32>
    %c0_15 = arith.constant 0 : index
    %c0_16 = arith.constant 0 : index
    %19 = vector.load %arg7[%c0_15, %c0_16] : memref<1x128xf32, #tpu.memory_space<vmem>>, vector<1x128xf32>
    %20 = vector.broadcast %19 : vector<1x128xf32> to vector<16x128xf32>
    %21 = arith.addf %18, %20 : vector<16x128xf32>
    %c0_17 = arith.constant 0 : index
    %c0_18 = arith.constant 0 : index
    %22 = vector.load %arg8[%c0_17, %c0_18] : memref<16x128xf32, #tpu.memory_space<vmem>>, vector<16x128xf32>
    tpu.vector_store %arg8[%c0_17, %c0_18], %21 {strides = array<i32>} : memref<16x128xf32, #tpu.memory_space<vmem>>, vector<16x128xf32>,
    return
  }
  func.func @transform_0(%arg0: i32) -> (i32, i32) {
    %c0_i32 = arith.constant 0 : i32
    %c0_i32_0 = arith.constant 0 : i32
    return %arg0, %c0_i32 : i32, i32
  }
  func.func @transform_1(%arg0: i32) -> (i32, i32) {
    %c0_i32 = arith.constant 0 : i32
    %c0_i32_0 = arith.constant 0 : i32
    %c0_i32_1 = arith.constant 0 : i32
    return %c0_i32, %c0_i32_0 : i32, i32
  }
  func.func @transform_2(%arg0: i32) -> (i32, i32) {
    %c0_i32 = arith.constant 0 : i32
    %c0_i32_0 = arith.constant 0 : i32
    %c0_i32_1 = arith.constant 0 : i32
    return %c0_i32, %c0_i32_0 : i32, i32
  }
  func.func @transform_3(%arg0: i32) -> (i32, i32) {
    %c0_i32 = arith.constant 0 : i32
    %c0_i32_0 = arith.constant 0 : i32
    %c0_i32_1 = arith.constant 0 : i32
    return %c0_i32, %c0_i32_0 : i32, i32
  }
  func.func @transform_4(%arg0: i32) -> (i32, i32) {
    %c0_i32 = arith.constant 0 : i32
    %c0_i32_0 = arith.constant 0 : i32
    %c0_i32_1 = arith.constant 0 : i32
    return %c0_i32, %c0_i32_0 : i32, i32
  }
  func.func @transform_5(%arg0: i32) -> (i32, i32) {
    %c0_i32 = arith.constant 0 : i32
    %c0_i32_0 = arith.constant 0 : i32
    %c0_i32_1 = arith.constant 0 : i32
    return %c0_i32, %c0_i32_0 : i32, i32
  }
  func.func @transform_6(%arg0: i32) -> (i32, i32) {
    %c0_i32 = arith.constant 0 : i32
    %c0_i32_0 = arith.constant 0 : i32
    %c0_i32_1 = arith.constant 0 : i32
    return %c0_i32, %c0_i32_0 : i32, i32
  }
  func.func @transform_7(%arg0: i32) -> (i32, i32) {
    %c0_i32 = arith.constant 0 : i32
    %c0_i32_0 = arith.constant 0 : i32
    return %arg0, %c0_i32 : i32, i32
  }
}

</mosaic_0001>

<llo_original>
// kernel: tpu_custom_call.1
$region0: #{tpu_custom_call.1}
  #allocation0 [shape = 'u32[]', space=smem, size = 0x4, offset = 0x4, fixed_abs, tag = 'smem constant byte address 0x4 - core index']
  #allocation1 [shape = 'u32[144,128]{1,0:T(1,128)}', space=vmem, size = 0x12000, scoped, tag = 'internal scratch']
  %s0 = inlined_call_operand.vmem [shape: bf16[16,42], index: 0, kind: input, shape index: {}]
  %s1 = inlined_call_operand.vmem [shape: bf16[42,128], index: 1, kind: input, shape index: {}]
  %s2 = inlined_call_operand.vmem [shape: f32[1,128], index: 2, kind: input, shape index: {}]
  %s3 = inlined_call_operand.vmem [shape: bf16[128,64], index: 3, kind: input, shape index: {}]
  %s4 = inlined_call_operand.vmem [shape: f32[1,64], index: 4, kind: input, shape index: {}]
  %s5 = inlined_call_operand.vmem [shape: bf16[64,128], index: 5, kind: input, shape index: {}]
  %s6 = inlined_call_operand.vmem [shape: f32[1,128], index: 6, kind: input, shape index: {}]
  %s7 = inlined_call_operand.hbm [shape: f32[16,128], index: 7, kind: output, shape index: {}]
  %s8 = sld [smem:[#allocation0]]
  $region38: #{tpu_custom_call.1} parent=0
    _
  %s10 = ssub.s32 1, %s8
  %s11 = scalar_select 0, %s10, %s8
  $region1: #{tpu_custom_call.1} parent=0
    #allocation2 [shape = 'u8[8192]{0}', space=vmem, size = 0x2000, scoped, tag = 'output window, operand 0, single buffered']
    #allocation3 [shape = 's32[1]{0}', space=sflag, size = 0x4, scoped, tag = 'scoped memory for tpu_custom_call.1']
    %12 = vsyncpa [#allocation3], 0
    // Predicated region
    $region2: #{tpu_custom_call.1} parent=1 // pred_check
      _
    $region3: #{tpu_custom_call.1} parent=1 // pred_check_branch
      %14 = sbr.rel (0) target = $region5
    $region4: #{tpu_custom_call.1} parent=1 // pred_region
      _
    $region5: #{tpu_custom_call.1} parent=1 // pred_fallthru
      _
    // Predicated region
    $region6: #{tpu_custom_call.1} parent=1 // pred_check
      _
    $region7: #{tpu_custom_call.1} parent=1 // pred_check_branch
      %16 = sbr.rel (0) target = $region9
    $region8: #{tpu_custom_call.1} parent=1 // pred_region
      _
    $region9: #{tpu_custom_call.1} parent=1 // pred_fallthru
      _
    // Predicated region
    $region10: #{tpu_custom_call.1} parent=1 // pred_check
      _
    $region11: #{tpu_custom_call.1} parent=1 // pred_check_branch
      %18 = sbr.rel (0) target = $region13
    $region12: #{tpu_custom_call.1} parent=1 // pred_region
      _
    $region13: #{tpu_custom_call.1} parent=1 // pred_fallthru
      _
    // Predicated region
    $region14: #{tpu_custom_call.1} parent=1 // pred_check
      _
    $region15: #{tpu_custom_call.1} parent=1 // pred_check_branch
      %20 = sbr.rel (0) target = $region17
    $region16: #{tpu_custom_call.1} parent=1 // pred_region
      _
    $region17: #{tpu_custom_call.1} parent=1 // pred_fallthru
      _
    // Predicated region
    $region18: #{tpu_custom_call.1} parent=1 // pred_check
      _
    $region19: #{tpu_custom_call.1} parent=1 // pred_check_branch
      %22 = sbr.rel (0) target = $region21
    $region20: #{tpu_custom_call.1} parent=1 // pred_region
      _
    $region21: #{tpu_custom_call.1} parent=1 // pred_fallthru
      _
    // Predicated region
    $region22: #{tpu_custom_call.1} parent=1 // pred_check
      _
    $region23: #{tpu_custom_call.1} parent=1 // pred_check_branch
      %24 = sbr.rel (0) target = $region25
    $region24: #{tpu_custom_call.1} parent=1 // pred_region
      _
    $region25: #{tpu_custom_call.1} parent=1 // pred_fallthru
      _
    // Predicated region
    $region26: #{tpu_custom_call.1} parent=1 // pred_check
      _
    $region27: #{tpu_custom_call.1} parent=1 // pred_check_branch
      %26 = sbr.rel (0) target = $region29
    $region28: #{tpu_custom_call.1} parent=1 // pred_region
      _
    $region29: #{tpu_custom_call.1} parent=1 // pred_fallthru
      _
    %v28 = vld [vmem:[%s0] sm:$0xf]
    %v29 = vld [vmem:[%s0 + $0x4] sm:$0xf]
    %v30 = vld [vmem:[%s1] sm:$0xf]
    %v31 = vld [vmem:[%s1 + $0x4] sm:$0xf]
    %v32 = vld [vmem:[%s1 + $0x8] sm:$0xf]
    %v33 = vld [vmem:[%s1 + $0xc] sm:$0xf]
    %v34 = vld [vmem:[%s1 + $0x10] sm:$0xf]
    %v35 = vld [vmem:[%s1 + $0x14] sm:$0x1]
    %v36 = vld [vmem:[%s2] sm:$0x1]
    %v38 = vlaneseq
    %v39 = vshrl.u32 %v38, 7
    %v40 = vsub.s32 0, %v39
    %v41 = vrot.slane %v36, %v40
    %v45 = vunpack.c.l.b16 %v28
    %v46 = vunpack.c.l.b16 %v29
    %v47 = vpack.c.b16 %v46, %v45
    %v54 = vunpack.c.l.b16 %v30
    %v55 = vunpack.c.l.b16 %v31
    %v56 = vunpack.c.l.b16 %v32
    %v57 = vunpack.c.l.b16 %v33
    %v58 = vunpack.c.l.b16 %v34
    %v59 = vunpack.c.l.b16 %v35
    %v60 = vpack.c.b16 %v55, %v54
    %v61 = vpack.c.b16 %v57, %v56
    %v62 = vpack.c.b16 %v59, %v58
    %vm65 = vcmask 343040
    %v67 = vsel %vm65, %v47, 0
    %vm69 = vcmask 1044480
    %v71 = vsel %vm69, %v62, 0
    %73 = vmatprep.subr.bf16.mxu0 0
    %74 = vmatpush1.bf16.msra.mxu0 0
    %75 = vmatprep.subr.bf16.mxu0 0
    %76 = vmatpush1.bf16.msra.mxu0 0
    %77 = vmatprep.subr.bf16.mxu0 0
    %78 = vmatpush1.bf16.msra.mxu0 0
    %79 = vmatprep.subr.bf16.mxu0 0
    %80 = vmatpush1.bf16.msra.mxu0 0
    %81 = vmatprep.subr.bf16.mxu0 0
    %82 = vmatpush1.bf16.msra.mxu0 0
    %83 = vmatprep.subr.bf16.mxu0 0
    %84 = vmatpush1.bf16.msra.mxu0 %v71
    %85 = vmatprep.subr.bf16.mxu0 0
    %86 = vmatpush1.bf16.msra.mxu0 %v61
    %87 = vmatprep.subr.bf16.mxu0 0
    %88 = vmatpush1.bf16.msra.mxu0 %v60
    %89 = vmatprep.subr.bf16.mxu0 0
    %90 = vmatpush2.bf16.msra.mxu0 0
    %91 = vmatprep.subr.bf16.mxu0 0
    %92 = vmatpush2.bf16.msra.mxu0 0
    %93 = vmatprep.subr.bf16.mxu0 0
    %94 = vmatpush2.bf16.msra.mxu0 0
    %95 = vmatprep.subr.bf16.mxu0 0
    %96 = vmatpush2.bf16.msra.mxu0 0
    %97 = vmatprep.subr.bf16.mxu0 0
    %98 = vmatpush2.bf16.msra.mxu0 0
    %99 = vmatprep.subr.bf16.mxu0 0
    %100 = vmatpush2.bf16.msra.mxu0 0
    %101 = vmatprep.subr.bf16.mxu0 0
    %102 = vmatpush2.bf16.msra.mxu0 0
    %103 = vmatprep.subr.bf16.mxu0 0
    %104 = vmatpush2.bf16.msra.mxu0 0
    %105 = vmatprep.mubr.bf16.mxu0 0
    %106 = vmatmul.mubr.bf16.gmra.mxu0 %v67
    %v107 = vpop.f32.mrf.mxu0
    %v108 = vadd.f32 %v41, %v107
    %v109 = vpop.f32.mrf.mxu0
    %v110 = vpop.f32.mrf.mxu0
    %v111 = vadd.f32 %v41, %v110
    %v112 = vpop.f32.mrf.mxu0
    %113 = vdwg.mxu0
    %v114 = vmax.f32 %v108, 0.0
    %v115 = vmax.f32 %v111, 0.0
    %v116 = vpack.c.bf16 %v115, %v114
    %v117 = vld [vmem:[%s3] sm:$0xf]
    %v118 = vld [vmem:[%s3 + $0x4] sm:$0xf]
    %v119 = vld [vmem:[%s3 + $0x8] sm:$0xf]
    %v120 = vld [vmem:[%s3 + $0xc] sm:$0xf]
    %v121 = vld [vmem:[%s3 + $0x10] sm:$0xf]
    %v122 = vld [vmem:[%s3 + $0x14] sm:$0xf]
    %v123 = vld [vmem:[%s3 + $0x18] sm:$0xf]
    %v124 = vld [vmem:[%s3 + $0x1c] sm:$0xf]
    %v125 = vld [vmem:[%s3 + $0x20] sm:$0xf]
    %v126 = vld [vmem:[%s3 + $0x24] sm:$0xf]
    %v127 = vld [vmem:[%s3 + $0x28] sm:$0xf]
    %v128 = vld [vmem:[%s3 + $0x2c] sm:$0xf]
    %v129 = vld [vmem:[%s3 + $0x30] sm:$0xf]
    %v130 = vld [vmem:[%s3 + $0x34] sm:$0xf]
    %v131 = vld [vmem:[%s3 + $0x38] sm:$0xf]
    %v132 = vld [vmem:[%s3 + $0x3c] sm:$0xf]
    %v133 = vld [vmem:[%s4] sm:$0x1]
    %v135 = vlaneseq
    %v136 = vshrl.u32 %v135, 7
    %v137 = vsub.s32 0, %v136
    %v138 = vrot.slane %v133, %v137
    %v156 = vunpack.c.l.b16 %v117
    %v157 = vunpack.c.l.b16 %v118
    %v158 = vunpack.c.l.b16 %v119
    %v159 = vunpack.c.l.b16 %v120
    %v160 = vunpack.c.l.b16 %v121
    %v161 = vunpack.c.l.b16 %v122
    %v162 = vunpack.c.l.b16 %v123
    %v163 = vunpack.c.l.b16 %v124
    %v164 = vunpack.c.l.b16 %v125
    %v165 = vunpack.c.l.b16 %v126
    %v166 = vunpack.c.l.b16 %v127
    %v167 = vunpack.c.l.b16 %v128
    %v168 = vunpack.c.l.b16 %v129
    %v169 = vunpack.c.l.b16 %v130
    %v170 = vunpack.c.l.b16 %v131
    %v171 = vunpack.c.l.b16 %v132
    %v172 = vpack.c.b16 %v157, %v156
    %v173 = vpack.c.b16 %v159, %v158
    %v174 = vpack.c.b16 %v161, %v160
    %v175 = vpack.c.b16 %v163, %v162
    %v176 = vpack.c.b16 %v165, %v164
    %v177 = vpack.c.b16 %v167, %v166
    %v178 = vpack.c.b16 %v169, %v168
    %v179 = vpack.c.b16 %v171, %v170
    %188 = vmatprep.subr.bf16.mxu0 0
    %189 = vmatpush1.bf16.msra.mxu0 %v179
    %190 = vmatprep.subr.bf16.mxu0 0
    %191 = vmatpush1.bf16.msra.mxu0 %v178
    %192 = vmatprep.subr.bf16.mxu0 0
    %193 = vmatpush1.bf16.msra.mxu0 %v177
    %194 = vmatprep.subr.bf16.mxu0 0
    %195 = vmatpush1.bf16.msra.mxu0 %v176
    %196 = vmatprep.subr.bf16.mxu0 0
    %197 = vmatpush1.bf16.msra.mxu0 %v175
    %198 = vmatprep.subr.bf16.mxu0 0
    %199 = vmatpush1.bf16.msra.mxu0 %v174
    %200 = vmatprep.subr.bf16.mxu0 0
    %201 = vmatpush1.bf16.msra.mxu0 %v173
    %202 = vmatprep.subr.bf16.mxu0 0
    %203 = vmatpush1.bf16.msra.mxu0 %v172
    %204 = vmatprep.subr.bf16.mxu0 0
    %205 = vmatpush2.bf16.msra.mxu0 0
    %206 = vmatprep.subr.bf16.mxu0 0
    %207 = vmatpush2.bf16.msra.mxu0 0
    %208 = vmatprep.subr.bf16.mxu0 0
    %209 = vmatpush2.bf16.msra.mxu0 0
    %210 = vmatprep.subr.bf16.mxu0 0
    %211 = vmatpush2.bf16.msra.mxu0 0
    %212 = vmatprep.subr.bf16.mxu0 0
    %213 = vmatpush2.bf16.msra.mxu0 0
    %214 = vmatprep.subr.bf16.mxu0 0
    %215 = vmatpush2.bf16.msra.mxu0 0
    %216 = vmatprep.subr.bf16.mxu0 0
    %217 = vmatpush2.bf16.msra.mxu0 0
    %218 = vmatprep.subr.bf16.mxu0 0
    %219 = vmatpush2.bf16.msra.mxu0 0
    %220 = vmatprep.mubr.bf16.mxu0 0
    %221 = vmatmul.mubr.bf16.gmra.mxu0 %v116
    %v222 = vpop.f32.mrf.mxu0
    %v223 = vadd.f32 %v138, %v222
    %v224 = vpop.f32.mrf.mxu0
    %v225 = vpop.f32.mrf.mxu0
    %v226 = vadd.f32 %v138, %v225
    %v227 = vpop.f32.mrf.mxu0
    %228 = vdwg.mxu0
    %v229 = vmax.f32 %v223, 0.0
    %v230 = vmax.f32 %v226, 0.0
    %v231 = vpack.c.bf16 %v230, %v229
    %v232 = vld [vmem:[%s5] sm:$0xf]
    %v233 = vld [vmem:[%s5 + $0x4] sm:$0xf]
    %v234 = vld [vmem:[%s5 + $0x8] sm:$0xf]
    %v235 = vld [vmem:[%s5 + $0xc] sm:$0xf]
    %v236 = vld [vmem:[%s5 + $0x10] sm:$0xf]
    %v237 = vld [vmem:[%s5 + $0x14] sm:$0xf]
    %v238 = vld [vmem:[%s5 + $0x18] sm:$0xf]
    %v239 = vld [vmem:[%s5 + $0x1c] sm:$0xf]
    %v240 = vld [vmem:[%s6] sm:$0x1]
    %v242 = vlaneseq
    %v243 = vshrl.u32 %v242, 7
    %v244 = vsub.s32 0, %v243
    %v245 = vrot.slane %v240, %v244
    %v255 = vunpack.c.l.b16 %v232
    %v256 = vunpack.c.l.b16 %v233
    %v257 = vunpack.c.l.b16 %v234
    %v258 = vunpack.c.l.b16 %v235
    %v259 = vunpack.c.l.b16 %v236
    %v260 = vunpack.c.l.b16 %v237
    %v261 = vunpack.c.l.b16 %v238
    %v262 = vunpack.c.l.b16 %v239
    %v263 = vpack.c.b16 %v256, %v255
    %v264 = vpack.c.b16 %v258, %v257
    %v265 = vpack.c.b16 %v260, %v259
    %v266 = vpack.c.b16 %v262, %v261
    %vm271 = vcmask 523264
    %v273 = vsel %vm271, %v231, 0
    %275 = vmatprep.subr.bf16.mxu0 0
    %276 = vmatpush1.bf16.msra.mxu0 0
    %277 = vmatprep.subr.bf16.mxu0 0
    %278 = vmatpush1.bf16.msra.mxu0 0
    %279 = vmatprep.subr.bf16.mxu0 0
    %280 = vmatpush1.bf16.msra.mxu0 0
    %281 = vmatprep.subr.bf16.mxu0 0
    %282 = vmatpush1.bf16.msra.mxu0 0
    %283 = vmatprep.subr.bf16.mxu0 0
    %284 = vmatpush1.bf16.msra.mxu0 %v266
    %285 = vmatprep.subr.bf16.mxu0 0
    %286 = vmatpush1.bf16.msra.mxu0 %v265
    %287 = vmatprep.subr.bf16.mxu0 0
    %288 = vmatpush1.bf16.msra.mxu0 %v264
    %289 = vmatprep.subr.bf16.mxu0 0
    %290 = vmatpush1.bf16.msra.mxu0 %v263
    %291 = vmatprep.subr.bf16.mxu0 0
    %292 = vmatpush2.bf16.msra.mxu0 0
    %293 = vmatprep.subr.bf16.mxu0 0
    %294 = vmatpush2.bf16.msra.mxu0 0
    %295 = vmatprep.subr.bf16.mxu0 0
    %296 = vmatpush2.bf16.msra.mxu0 0
    %297 = vmatprep.subr.bf16.mxu0 0
    %298 = vmatpush2.bf16.msra.mxu0 0
    %299 = vmatprep.subr.bf16.mxu0 0
    %300 = vmatpush2.bf16.msra.mxu0 0
    %301 = vmatprep.subr.bf16.mxu0 0
    %302 = vmatpush2.bf16.msra.mxu0 0
    %303 = vmatprep.subr.bf16.mxu0 0
    %304 = vmatpush2.bf16.msra.mxu0 0
    %305 = vmatprep.subr.bf16.mxu0 0
    %306 = vmatpush2.bf16.msra.mxu0 0
    %307 = vmatprep.mubr.bf16.mxu0 0
    %308 = vmatmul.mubr.bf16.gmra.mxu0 %v273
    %v309 = vpop.f32.mrf.mxu0
    %v310 = vadd.f32 %v245, %v309
    %v311 = vpop.f32.mrf.mxu0
    %v312 = vpop.f32.mrf.mxu0
    %v313 = vadd.f32 %v245, %v312
    %v314 = vpop.f32.mrf.mxu0
    %315 = vdwg.mxu0
    %316 = vst [vmem:[#allocation2] sm:$0xff] %v310
    %317 = vst [vmem:[#allocation2 + $0x8] sm:$0xff] %v313
    // Predicated region
    $region30: #{tpu_custom_call.1} parent=1 // pred_check
      _
    $region31: #{tpu_custom_call.1} parent=1 // pred_check_branch
      %319 = sbr.rel (0) target = $region33
    $region32: #{tpu_custom_call.1} parent=1 // pred_region
      %s321 = ssub.s32 256, 256
      %322 = vsyncadd [#allocation3], %s321
      %s323 = sshll.u32 [#allocation2], 4
      %s324 = int_to_ptr.vmem [resolvable:$true] %s323
      %329 = dma.vmem_to_hbm [thread:$0]  %s324, 256, %s7, [#allocation3], 128, 128, 8
    $region33: #{tpu_custom_call.1} parent=1 // pred_fallthru
      _
    // Predicated region
    $region34: #{tpu_custom_call.1} parent=1 // pred_check
      _
    $region35: #{tpu_custom_call.1} parent=1 // pred_check_branch
      %331 = sbr.rel (0) target = $region37
    $region36: #{tpu_custom_call.1} parent=1 // pred_region
      %332 = dma.done [#allocation3], 256
    $region37: #{tpu_custom_call.1} parent=1 // pred_fallthru
      _
    %333 = vsyncpa [#allocation3], 1

</llo_original>
